<compile_context>
chip_gen: v5e
topology: v5e:2x2
jax: 0.10.0
libtpu: 0.0.40
codegen_flags: <defaults>
</compile_context>

<pallas_src>
import functools

import jax
import jax.numpy as jnp
from jax.experimental import pallas as pl
from jax.experimental.pallas import tpu as pltpu


def _svq_kernel(x_ref, w1_ref, b1_ref, w2t_ref, b2_ref, w2cbt_ref, b2cbt_ref,
                y_ref, cw_ref, *, use_bf16):
    mm_dtype = jnp.bfloat16 if use_bf16 else jnp.float32

    # x_ref: (C, tn) channel-major slab of tokens (NCHW-native layout).
    x = x_ref[...].astype(mm_dtype)

    # h^T = ReLU(W1 @ x + b1)                                  -> (K, tn)
    h = jnp.dot(w1_ref[...], x, preferred_element_type=jnp.float32)
    h = jnp.maximum(h + b1_ref[...], 0.0)                      # f32 bias + ReLU
    hb = h.astype(mm_dtype)                                    # cast once, reuse

    # y^T = W2cb^T @ h^T + b2cb^T (codebook folded into W2)    -> (C, tn)
    y = jnp.dot(w2cbt_ref[...], hb,
                preferred_element_type=jnp.float32) + b2cbt_ref[...]
    y_ref[...] = y.astype(y_ref.dtype)

    # cw = h @ W2^T + b2 (token-major code weights)            -> (tn, S)
    ht = jnp.transpose(hb, (1, 0))                             # small XLU transpose
    cw = jnp.dot(ht, w2t_ref[...],
                 preferred_element_type=jnp.float32) + b2_ref[...]
    cw_ref[...] = cw.astype(cw_ref.dtype)


def _choose_token_tile(hw, max_tn=512):
    """Token-tile size: lane-dense multiple of 128 when tiling, else full HW.

    If H*W fits in one tile we take the full extent (always legal under the
    (8, 128) block rule).  Otherwise the tile is a multiple of 128 (lane-dense
    stores, MXU-friendly); a ragged trailing tile is handled by Pallas's
    masked boundary writes.
    """
    if hw <= max_tn:
        return hw
    return max(128, max_tn - (max_tn % 128))


def svq_pallas(x_bc_hw, w1, b1_col, w2t, b2_row, w2cbt, b2cbt_col, *,
               use_bf16=True, max_tn=512):
    """x_bc_hw: (B, C, HW) NCHW-native activations.

    w1:(K,C) b1_col:(K,1) w2t:(K,S) b2_row:(1,S) w2cbt:(C,K) b2cbt_col:(C,1).
    Returns (sparsereg (B, C, HW) f32, code_weight (B, HW, S) f32).
    """
    B, C, HW = x_bc_hw.shape
    K = w1.shape[0]
    S = w2t.shape[1]

    tn = _choose_token_tile(HW, max_tn)
    grid = (B, pl.cdiv(HW, tn))

    mm_dtype = jnp.bfloat16 if use_bf16 else jnp.float32
    w1 = w1.astype(mm_dtype)
    w2t = w2t.astype(mm_dtype)
    w2cbt = w2cbt.astype(mm_dtype)

    full = lambda b, t: (0, 0)
    cost = pl.CostEstimate(
        flops=2 * B * HW * (C * K + K * S + K * C),
        transcendentals=0,
        bytes_accessed=4 * B * HW * (2 * C + S),
    )

    y, cw = pl.pallas_call(
        functools.partial(_svq_kernel, use_bf16=use_bf16),
        out_shape=(
            jax.ShapeDtypeStruct((B, C, HW), jnp.float32),   # sparsereg (NCHW)
            jax.ShapeDtypeStruct((B, HW, S), jnp.float32),   # code_weight
        ),
        grid_spec=pltpu.PrefetchScalarGridSpec(
            num_scalar_prefetch=0,
            grid=grid,
            in_specs=[
                pl.BlockSpec((None, C, tn), lambda b, t: (b, 0, t)),  # x slab
                pl.BlockSpec((K, C), full),      # W1            (resident)
                pl.BlockSpec((K, 1), full),      # b1 column     (resident)
                pl.BlockSpec((K, S), full),      # W2^T          (resident)
                pl.BlockSpec((1, S), full),      # b2 row        (resident)
                pl.BlockSpec((C, K), full),      # (W2^T @ codebook)^T
                pl.BlockSpec((C, 1), full),      # (b2 @ codebook)^T
            ],
            out_specs=[
                pl.BlockSpec((None, C, tn), lambda b, t: (b, 0, t)),
                pl.BlockSpec((None, tn, S), lambda b, t: (b, t, 0)),
            ],
        ),
        compiler_params=pltpu.CompilerParams(
            dimension_semantics=("parallel", "parallel")),
        cost_estimate=cost,
    )(x_bc_hw, w1, b1_col, w2t, b2_row, w2cbt, b2cbt_col)
    return y, cw


def svq_forward(embed, params, *, use_bf16=True):
    """Replicates SVQ.forward (eval mode / evaluate_usage=False).

    embed: (B, C, H, W) float32.
    Returns (sparsereg, code_weight, codebook, perplexity) as in the module.
    """
    B, C, H, W = embed.shape
    HW = H * W

    w1 = params["w1"]              # (K, C)  Linear(C -> K) weight
    b1 = params["b1"]              # (K,)
    w2 = params["w2"]              # (S, K)  Linear(K -> S) weight
    b2 = params["b2"]              # (S,)
    codebook = params["codebook"]  # (S, C)

    w2t = w2.T                                   # (K, S)
    # Fold the codebook matmul into the second linear (both maps are linear):
    w2cbt = (w2t @ codebook).T                   # (C, K)
    b2cbt = (b2[None, :] @ codebook).T           # (C, 1)

    x = embed.reshape(B, C, HW)                  # free reshape (NCHW-native)
    y, code_weight = svq_pallas(
        x, w1, b1[:, None], w2t, b2[None, :], w2cbt, b2cbt,
        use_bf16=use_bf16)

    sparsereg = y.reshape(B, C, H, W)            # free reshape back to NCHW
    # TODO(synk): evaluate_codebook_usage / perplexity is a training-only
    # statistics path; eval mode returns an empty dict, matching the module.
    perplexity = {}
    return sparsereg, code_weight, codebook, perplexity


def init_params(key, input_dim, codebook_size, middim):
    """Deterministic synthetic init matching the module's parameter shapes."""
    k = min(middim, codebook_size)
    k1, k2, k3, k4, k5 = jax.random.split(key, 5)
    w1 = jax.random.normal(k1, (k, input_dim), jnp.float32) * 0.1
    b1 = jax.random.normal(k2, (k,), jnp.float32) * 0.01
    w2 = jax.random.normal(k3, (codebook_size, k), jnp.float32) * 0.1
    b2 = jax.random.normal(k4, (codebook_size,), jnp.float32) * 0.01
    codebook = jax.random.normal(k5, (codebook_size, input_dim), jnp.float32)
    return {"w1": w1, "b1": b1, "w2": w2, "b2": b2, "codebook": codebook}


def _reference(embed, params):
    """Pure-JAX f32 reference with the original (unfused) PyTorch math."""
    B, C, H, W = embed.shape
    x = jnp.transpose(embed, (0, 2, 3, 1)).reshape(B, H * W, C)
    h = jnp.maximum(x @ params["w1"].T + params["b1"], 0.0)
    cw = h @ params["w2"].T + params["b2"]
    y = cw @ params["codebook"]
    sparsereg = jnp.transpose(y.reshape(B, H, W, C), (0, 3, 1, 2))
    return sparsereg, cw


if __name__ == "__main__":
    B, C, H, W = 2, 16, 8, 8          # input_dim = 16
    codebook_size, middim = 64, 32    # k = min(middim, codebook_size) = 32

    key = jax.random.PRNGKey(0)
    k_x, k_p = jax.random.split(key)
    embed = jax.random.normal(k_x, (B, C, H, W), jnp.float32)
    params = init_params(k_p, C, codebook_size, middim)

    fwd = jax.jit(functools.partial(svq_forward, params=params))
    sparsereg, code_weight, codebook, perplexity = fwd(embed)
    jax.block_until_ready(sparsereg)
    jax.block_until_ready(code_weight)

    # Sanity check vs pure-JAX f32 reference (kernel uses bf16 MXU operands
    # with f32 accumulation, so tolerances are bf16-appropriate).
    ref_sparsereg, ref_cw = _reference(embed, params)
    assert sparsereg.shape == (B, C, H, W)
    assert code_weight.shape == (B, H * W, codebook_size)
    assert codebook.shape == (codebook_size, C)
    assert perplexity == {}
    assert jnp.allclose(sparsereg, ref_sparsereg, atol=1e-1, rtol=1e-1)
    assert jnp.allclose(code_weight, ref_cw, atol=1e-1, rtol=1e-1)

    print("KERNEL_OK")
</pallas_src>

<mosaic_0001>
module attributes {stable_mosaic.version = 11 : i64} {
  func.func @_svq_kernel(%arg0: i32, %arg1: i32, %arg2: memref<1x16x64xf32, #tpu.memory_space<vmem>>, %arg3: memref<32x16xbf16, #tpu.memory_space<vmem>>, %arg4: memref<32x1xf32, #tpu.memory_space<vmem>>, %arg5: memref<32x64xbf16, #tpu.memory_space<vmem>>, %arg6: memref<1x64xf32, #tpu.memory_space<vmem>>, %arg7: memref<16x32xbf16, #tpu.memory_space<vmem>>, %arg8: memref<16x1xf32, #tpu.memory_space<vmem>>, %arg9: memref<1x16x64xf32, #tpu.memory_space<vmem>>, %arg10: memref<1x64x64xf32, #tpu.memory_space<vmem>>) attributes {dimension_semantics = [#tpu.dimension_semantics<parallel>, #tpu.dimension_semantics<parallel>], iteration_bounds = array<i64: 2, 1>, scalar_prefetch = 0 : i64, scratch_operands = 0 : i64, tpu.core_type = #tpu.core_type<tc>, window_params = [{transform_indices = @transform_0, window_bounds = array<i64: 1, 16, 64>}, {pipeline_mode = #tpu.pipeline_mode<synchronous>, transform_indices = @transform_1, window_bounds = array<i64: 32, 16>}, {pipeline_mode = #tpu.pipeline_mode<synchronous>, transform_indices = @transform_2, window_bounds = array<i64: 32, 1>}, {pipeline_mode = #tpu.pipeline_mode<synchronous>, transform_indices = @transform_3, window_bounds = array<i64: 32, 64>}, {pipeline_mode = #tpu.pipeline_mode<synchronous>, transform_indices = @transform_4, window_bounds = array<i64: 1, 64>}, {pipeline_mode = #tpu.pipeline_mode<synchronous>, transform_indices = @transform_5, window_bounds = array<i64: 16, 32>}, {pipeline_mode = #tpu.pipeline_mode<synchronous>, transform_indices = @transform_6, window_bounds = array<i64: 16, 1>}, {transform_indices = @transform_7, window_bounds = array<i64: 1, 16, 64>}, {transform_indices = @transform_8, window_bounds = array<i64: 1, 64, 64>}]} {
    %c0 = arith.constant 0 : index
    %c0_0 = arith.constant 0 : index
    %c0_1 = arith.constant 0 : index
    %0 = vector.load %arg2[%c0, %c0_0, %c0_1] : memref<1x16x64xf32, #tpu.memory_space<vmem>>, vector<1x16x64xf32>
    %1 = vector.shape_cast %0 : vector<1x16x64xf32> to vector<16x64xf32>
    %2 = arith.truncf %1 : vector<16x64xf32> to vector<16x64xbf16>
    %c0_2 = arith.constant 0 : index
    %c0_3 = arith.constant 0 : index
    %3 = vector.load %arg3[%c0_2, %c0_3] : memref<32x16xbf16, #tpu.memory_space<vmem>>, vector<32x16xbf16>
    %cst = arith.constant dense<0.000000e+00> : vector<32x64xf32>
    %4 = tpu.matmul %3, %2, %cst {dimension_numbers = #tpu.dot_dimension_numbers<[1], [0], [0], [1], [0, 0, 1, 1], [], []>} : vector<32x16xbf16>, vector<16x64xbf16>, vector<32x64xf32> -> vector<32x64xf32>
    %c0_4 = arith.constant 0 : index
    %c0_5 = arith.constant 0 : index
    %5 = vector.load %arg4[%c0_4, %c0_5] : memref<32x1xf32, #tpu.memory_space<vmem>>, vector<32x1xf32>
    %6 = vector.broadcast %5 : vector<32x1xf32> to vector<32x64xf32>
    %7 = arith.addf %4, %6 : vector<32x64xf32>
    %cst_6 = arith.constant 0.000000e+00 : f32
    %8 = vector.broadcast %cst_6 : f32 to vector<32x64xf32>
    %9 = arith.maximumf %7, %8 : vector<32x64xf32>
    %10 = arith.truncf %9 : vector<32x64xf32> to vector<32x64xbf16>
    %c0_7 = arith.constant 0 : index
    %c0_8 = arith.constant 0 : index
    %11 = vector.load %arg7[%c0_7, %c0_8] : memref<16x32xbf16, #tpu.memory_space<vmem>>, vector<16x32xbf16>
    %cst_9 = arith.constant dense<0.000000e+00> : vector<16x64xf32>
    %12 = tpu.matmul %11, %10, %cst_9 {dimension_numbers = #tpu.dot_dimension_numbers<[1], [0], [0], [1], [0, 0, 1, 1], [], []>} : vector<16x32xbf16>, vector<32x64xbf16>, vector<16x64xf32> -> vector<16x64xf32>
    %c0_10 = arith.constant 0 : index
    %c0_11 = arith.constant 0 : index
    %13 = vector.load %arg8[%c0_10, %c0_11] : memref<16x1xf32, #tpu.memory_space<vmem>>, vector<16x1xf32>
    %14 = vector.broadcast %13 : vector<16x1xf32> to vector<16x64xf32>
    %15 = arith.addf %12, %14 : vector<16x64xf32>
    %c0_12 = arith.constant 0 : index
    %c0_13 = arith.constant 0 : index
    %c0_14 = arith.constant 0 : index
    %16 = vector.load %arg9[%c0_12, %c0_13, %c0_14] : memref<1x16x64xf32, #tpu.memory_space<vmem>>, vector<1x16x64xf32>
    %17 = vector.shape_cast %16 : vector<1x16x64xf32> to vector<16x64xf32>
    %18 = vector.shape_cast %15 : vector<16x64xf32> to vector<1x16x64xf32>
    tpu.vector_store %arg9[%c0_12, %c0_13, %c0_14], %18 {strides = array<i32>} : memref<1x16x64xf32, #tpu.memory_space<vmem>>, vector<1x16x64xf32>,
    %19 = tpu.transpose %10, [1, 0] : vector<32x64xbf16> -> vector<64x32xbf16>
    %c0_15 = arith.constant 0 : index
    %c0_16 = arith.constant 0 : index
    %20 = vector.load %arg5[%c0_15, %c0_16] : memref<32x64xbf16, #tpu.memory_space<vmem>>, vector<32x64xbf16>
    %cst_17 = arith.constant dense<0.000000e+00> : vector<64x64xf32>
    %21 = tpu.matmul %19, %20, %cst_17 {dimension_numbers = #tpu.dot_dimension_numbers<[1], [0], [0], [1], [0, 0, 1, 1], [], []>} : vector<64x32xbf16>, vector<32x64xbf16>, vector<64x64xf32> -> vector<64x64xf32>
    %c0_18 = arith.constant 0 : index
    %c0_19 = arith.constant 0 : index
    %22 = vector.load %arg6[%c0_18, %c0_19] : memref<1x64xf32, #tpu.memory_space<vmem>>, vector<1x64xf32>
    %23 = vector.broadcast %22 : vector<1x64xf32> to vector<64x64xf32>
    %24 = arith.addf %21, %23 : vector<64x64xf32>
    %c0_20 = arith.constant 0 : index
    %c0_21 = arith.constant 0 : index
    %c0_22 = arith.constant 0 : index
    %25 = vector.load %arg10[%c0_20, %c0_21, %c0_22] : memref<1x64x64xf32, #tpu.memory_space<vmem>>, vector<1x64x64xf32>
    %26 = vector.shape_cast %25 : vector<1x64x64xf32> to vector<64x64xf32>
    %27 = vector.shape_cast %24 : vector<64x64xf32> to vector<1x64x64xf32>
    tpu.vector_store %arg10[%c0_20, %c0_21, %c0_22], %27 {strides = array<i32>} : memref<1x64x64xf32, #tpu.memory_space<vmem>>, vector<1x64x64xf32>,
    return
  }
  func.func @transform_0(%arg0: i32, %arg1: i32) -> (i32, i32, i32) {
    %c0_i32 = arith.constant 0 : i32
    %c0_i32_0 = arith.constant 0 : i32
    return %arg0, %c0_i32, %arg1 : i32, i32, i32
  }
  func.func @transform_1(%arg0: i32, %arg1: i32) -> (i32, i32) {
    %c0_i32 = arith.constant 0 : i32
    %c0_i32_0 = arith.constant 0 : i32
    %c0_i32_1 = arith.constant 0 : i32
    return %c0_i32, %c0_i32_0 : i32, i32
  }
  func.func @transform_2(%arg0: i32, %arg1: i32) -> (i32, i32) {
    %c0_i32 = arith.constant 0 : i32
    %c0_i32_0 = arith.constant 0 : i32
    %c0_i32_1 = arith.constant 0 : i32
    return %c0_i32, %c0_i32_0 : i32, i32
  }
  func.func @transform_3(%arg0: i32, %arg1: i32) -> (i32, i32) {
    %c0_i32 = arith.constant 0 : i32
    %c0_i32_0 = arith.constant 0 : i32
    %c0_i32_1 = arith.constant 0 : i32
    return %c0_i32, %c0_i32_0 : i32, i32
  }
  func.func @transform_4(%arg0: i32, %arg1: i32) -> (i32, i32) {
    %c0_i32 = arith.constant 0 : i32
    %c0_i32_0 = arith.constant 0 : i32
    %c0_i32_1 = arith.constant 0 : i32
    return %c0_i32, %c0_i32_0 : i32, i32
  }
  func.func @transform_5(%arg0: i32, %arg1: i32) -> (i32, i32) {
    %c0_i32 = arith.constant 0 : i32
    %c0_i32_0 = arith.constant 0 : i32
    %c0_i32_1 = arith.constant 0 : i32
    return %c0_i32, %c0_i32_0 : i32, i32
  }
  func.func @transform_6(%arg0: i32, %arg1: i32) -> (i32, i32) {
    %c0_i32 = arith.constant 0 : i32
    %c0_i32_0 = arith.constant 0 : i32
    %c0_i32_1 = arith.constant 0 : i32
    return %c0_i32, %c0_i32_0 : i32, i32
  }
  func.func @transform_7(%arg0: i32, %arg1: i32) -> (i32, i32, i32) {
    %c0_i32 = arith.constant 0 : i32
    %c0_i32_0 = arith.constant 0 : i32
    return %arg0, %c0_i32, %arg1 : i32, i32, i32
  }
  func.func @transform_8(%arg0: i32, %arg1: i32) -> (i32, i32, i32) {
    %c0_i32 = arith.constant 0 : i32
    %c0_i32_0 = arith.constant 0 : i32
    return %arg0, %arg1, %c0_i32 : i32, i32, i32
  }
}

</mosaic_0001>

<llo_original>
// kernel: svq_forward.1
$region0: #{svq_forward.1}
  #allocation0 [shape = 'u32[]', space=smem, size = 0x4, offset = 0x4, fixed_abs, tag = 'smem constant byte address 0x4 - core index']
  #allocation1 [shape = 'u32[72,128]{1,0:T(1,128)}', space=vmem, size = 0x9000, scoped, tag = 'internal scratch']
  %s0 = inlined_call_operand.vmem [shape: f32[2,16,64], index: 0, kind: input, shape index: {}]
  %s1 = inlined_call_operand.vmem [shape: bf16[32,16], index: 1, kind: input, shape index: {}]
  %s2 = inlined_call_operand.vmem [shape: f32[32,1], index: 2, kind: input, shape index: {}]
  %s3 = inlined_call_operand.vmem [shape: bf16[32,64], index: 3, kind: input, shape index: {}]
  %s4 = inlined_call_operand.vmem [shape: f32[1,64], index: 4, kind: input, shape index: {}]
  %s5 = inlined_call_operand.vmem [shape: bf16[16,32], index: 5, kind: input, shape index: {}]
  %s6 = inlined_call_operand.vmem [shape: f32[16,1], index: 6, kind: input, shape index: {}]
  %s7 = inlined_call_operand.vmem [shape: f32[2,16,64], index: 7, kind: output, shape index: {0}]
  %s8 = inlined_call_operand.hbm [shape: f32[2,64,64], index: 8, kind: output, shape index: {1}]
  %9 = xla_tuple %s7, %s8
  %s10 = sld [smem:[#allocation0]]
  $region69: #{svq_forward.1} parent=0
    _
  %s12 = ssub.s32 1, %s10
  %s13 = scalar_select 0, %s12, %s10
  $region1: #{svq_forward.1} parent=0
    #allocation2 [shape = 'u8[65536]{0}', space=vmem, size = 0x10000, scoped, tag = 'output window, operand 1']
    #allocation3 [shape = 's32[2]{0}', space=sflag, size = 0x8, scoped, tag = 'scoped memory for svq_forward.1']
    %14 = vsyncpa [#allocation3], 0
    %s15 = scalar_lea.sflag [#allocation3], 1
    %16 = vsyncpa %s15, 0
    loop: start=0, step=1, limit=4
    $region2: #{svq_forward.1} parent=1 // loop_pre_header
      _
    $region3: #{svq_forward.1} parent=1 // loop_header
      %s18 = sphi 0, %s22
      %p19 = scmp.ge.s32.totalorder %s18, 4
      %s25 = sphi 0, %s37
      %s26 = sphi 0, %s33
      %s27 = sphi 0, %s25
      %s28 = sphi 0, %s26
      %s29 = sphi 0, %s27
      %s30 = sphi 0, %s28
      %s42 = sphi 0, %s44
      %s45 = sphi 0, %s42
      %s46 = sphi 0, %s45
      %s62 = sphi 0, %s46
      %s66 = sphi 0, %s66
      %s68 = sphi 0, %s66
      %s69 = sphi 0, %s68
      %s83 = sphi 0, %s69
      %s87 = sphi 0, %s87
      %s89 = sphi 0, %s87
      %s90 = sphi 0, %s89
      %s104 = sphi 0, %s90
      %s108 = sphi 0, %s108
      %s110 = sphi 0, %s108
      %s111 = sphi 0, %s110
      %s125 = sphi 0, %s111
      %s129 = sphi 0, %s129
      %s131 = sphi 0, %s129
      %s132 = sphi 0, %s131
      %s146 = sphi 0, %s132
      %s150 = sphi 0, %s150
      %s152 = sphi 0, %s150
      %s153 = sphi 0, %s152
      %s167 = sphi 0, %s153
      %s171 = sphi 0, %s171
      %s173 = sphi 0, %s171
      %s174 = sphi 0, %s173
      %s188 = sphi 0, %s174
      %s196 = sphi 0, %s198
      %s199 = sphi 0, %s196
      %s200 = sphi 0, %s199
      %s216 = sphi 0, %s200
      %s224 = sphi 0, %s226
      %s227 = sphi 0, %s224
      %s228 = sphi 0, %s227
      %s244 = sphi 0, %s228
    $region4: #{svq_forward.1} parent=1 // loop_header_branch
      %21 = sbr.rel (%p19) target = $region8
    $region5: #{svq_forward.1} parent=1 // loop_body
      %s23 = ssub.s32 %s18, 1
      %s24 = ssub.s32 %s18, 2
      %s31 = sadd.s32 1, %s26
      %p32 = scmp.ge.s32.totalorder %s31, 1
      %s33 = scalar_select %p32, 0, %s31
      %s34 = sadd.s32 1, %s25
      %s35 = scalar_select %p32, %s34, %s25
      %p36 = scmp.ge.s32.totalorder %s35, 2
      %s37 = scalar_select %p36, 0, %s35
      %s38 = ssub.s32 %s25, %s37
      %s39 = ssub.s32 %s26, %s33
      %s40 = sor.u32 %s38, %s39
      %p41 = scmp.eq.s32.totalorder %s40, 0
      %s43 = sadd.s32 %s42, 1
      %s44 = scalar_select %p41, %s42, %s43
      %p47 = pneg %p41
      %p48 = scmp.eq.s32.totalorder %s18, 1
      %p49 = por %p47, %p48
      %p50 = scmp.ne.s32.totalorder %s42, %s45
      %p51 = scmp.eq.s32.totalorder %s18, 0
      %p52 = por %p50, %p51
      %p53 = scmp.ne.s32.totalorder %s42, %s45
      %p54 = scmp.eq.s32.totalorder %s23, 1
      %p55 = por %p53, %p54
      %p56 = scmp.ne.s32.totalorder %s45, %s46
      %p57 = scmp.eq.s32.totalorder %s23, 0
      %p58 = por %p56, %p57
      %p59 = scmp.ne.s32.totalorder %s45, %s46
      %p60 = scmp.eq.s32.totalorder %s24, 1
      %p61 = por %p59, %p60
      %p63 = scmp.ne.s32.totalorder %s46, %s62
      %p64 = scmp.eq.s32.totalorder %s24, 0
      %p65 = por %p63, %p64
      %s67 = sadd.s32 %s66, 1
      %p70 = scmp.eq.s32.totalorder %s18, 1
      %p71 = scmp.ne.s32.totalorder %s66, %s68
      %p72 = scmp.eq.s32.totalorder %s18, 0
      %p73 = por %p71, %p72
      %p74 = scmp.ne.s32.totalorder %s66, %s68
      %p75 = scmp.eq.s32.totalorder %s23, 1
      %p76 = por %p74, %p75
      %p77 = scmp.ne.s32.totalorder %s68, %s69
      %p78 = scmp.eq.s32.totalorder %s23, 0
      %p79 = por %p77, %p78
      %p80 = scmp.ne.s32.totalorder %s68, %s69
      %p81 = scmp.eq.s32.totalorder %s24, 1
      %p82 = por %p80, %p81
      %p84 = scmp.ne.s32.totalorder %s69, %s83
      %p85 = scmp.eq.s32.totalorder %s24, 0
      %p86 = por %p84, %p85
      %s88 = sadd.s32 %s87, 1
      %p91 = scmp.eq.s32.totalorder %s18, 1
      %p92 = scmp.ne.s32.totalorder %s87, %s89
      %p93 = scmp.eq.s32.totalorder %s18, 0
      %p94 = por %p92, %p93
      %p95 = scmp.ne.s32.totalorder %s87, %s89
      %p96 = scmp.eq.s32.totalorder %s23, 1
      %p97 = por %p95, %p96
      %p98 = scmp.ne.s32.totalorder %s89, %s90
      %p99 = scmp.eq.s32.totalorder %s23, 0
      %p100 = por %p98, %p99
      %p101 = scmp.ne.s32.totalorder %s89, %s90
      %p102 = scmp.eq.s32.totalorder %s24, 1
      %p103 = por %p101, %p102
      %p105 = scmp.ne.s32.totalorder %s90, %s104
      %p106 = scmp.eq.s32.totalorder %s24, 0
      %p107 = por %p105, %p106
      %s109 = sadd.s32 %s108, 1
      %p112 = scmp.eq.s32.totalorder %s18, 1
      %p113 = scmp.ne.s32.totalorder %s108, %s110
      %p114 = scmp.eq.s32.totalorder %s18, 0
      %p115 = por %p113, %p114
      %p116 = scmp.ne.s32.totalorder %s108, %s110
      %p117 = scmp.eq.s32.totalorder %s23, 1
      %p118 = por %p116, %p117
      %p119 = scmp.ne.s32.totalorder %s110, %s111
      %p120 = scmp.eq.s32.totalorder %s23, 0
      %p121 = por %p119, %p120
      %p122 = scmp.ne.s32.totalorder %s110, %s111
      %p123 = scmp.eq.s32.totalorder %s24, 1
      %p124 = por %p122, %p123
      %p126 = scmp.ne.s32.totalorder %s111, %s125
      %p127 = scmp.eq.s32.totalorder %s24, 0
      %p128 = por %p126, %p127
      %s130 = sadd.s32 %s129, 1
      %p133 = scmp.eq.s32.totalorder %s18, 1
      %p134 = scmp.ne.s32.totalorder %s129, %s131
      %p135 = scmp.eq.s32.totalorder %s18, 0
      %p136 = por %p134, %p135
      %p137 = scmp.ne.s32.totalorder %s129, %s131
      %p138 = scmp.eq.s32.totalorder %s23, 1
      %p139 = por %p137, %p138
      %p140 = scmp.ne.s32.totalorder %s131, %s132
      %p141 = scmp.eq.s32.totalorder %s23, 0
      %p142 = por %p140, %p141
      %p143 = scmp.ne.s32.totalorder %s131, %s132
      %p144 = scmp.eq.s32.totalorder %s24, 1
      %p145 = por %p143, %p144
      %p147 = scmp.ne.s32.totalorder %s132, %s146
      %p148 = scmp.eq.s32.totalorder %s24, 0
      %p149 = por %p147, %p148
      %s151 = sadd.s32 %s150, 1
      %p154 = scmp.eq.s32.totalorder %s18, 1
      %p155 = scmp.ne.s32.totalorder %s150, %s152
      %p156 = scmp.eq.s32.totalorder %s18, 0
      %p157 = por %p155, %p156
      %p158 = scmp.ne.s32.totalorder %s150, %s152
      %p159 = scmp.eq.s32.totalorder %s23, 1
      %p160 = por %p158, %p159
      %p161 = scmp.ne.s32.totalorder %s152, %s153
      %p162 = scmp.eq.s32.totalorder %s23, 0
      %p163 = por %p161, %p162
      %p164 = scmp.ne.s32.totalorder %s152, %s153
      %p165 = scmp.eq.s32.totalorder %s24, 1
      %p166 = por %p164, %p165
      %p168 = scmp.ne.s32.totalorder %s153, %s167
      %p169 = scmp.eq.s32.totalorder %s24, 0
      %p170 = por %p168, %p169
      %s172 = sadd.s32 %s171, 1
      %p175 = scmp.eq.s32.totalorder %s18, 1
      %p176 = scmp.ne.s32.totalorder %s171, %s173
      %p177 = scmp.eq.s32.totalorder %s18, 0
      %p178 = por %p176, %p177
      %p179 = scmp.ne.s32.totalorder %s171, %s173
      %p180 = scmp.eq.s32.totalorder %s23, 1
      %p181 = por %p179, %p180
      %p182 = scmp.ne.s32.totalorder %s173, %s174
      %p183 = scmp.eq.s32.totalorder %s23, 0
      %p184 = por %p182, %p183
      %p185 = scmp.ne.s32.totalorder %s173, %s174
      %p186 = scmp.eq.s32.totalorder %s24, 1
      %p187 = por %p185, %p186
      %p189 = scmp.ne.s32.totalorder %s174, %s188
      %p190 = scmp.eq.s32.totalorder %s24, 0
      %p191 = por %p189, %p190
      %s192 = ssub.s32 %s25, %s37
      %s193 = ssub.s32 %s26, %s33
      %s194 = sor.u32 %s192, %s193
      %p195 = scmp.eq.s32.totalorder %s194, 0
      %s197 = sadd.s32 %s196, 1
      %s198 = scalar_select %p195, %s196, %s197
      %p201 = pneg %p195
      %p202 = scmp.eq.s32.totalorder %s18, 1
      %p203 = por %p201, %p202
      %p204 = scmp.ne.s32.totalorder %s196, %s199
      %p205 = scmp.eq.s32.totalorder %s18, 0
      %p206 = por %p204, %p205
      %p207 = scmp.ne.s32.totalorder %s196, %s199
      %p208 = scmp.eq.s32.totalorder %s23, 1
      %p209 = por %p207, %p208
      %p210 = scmp.ne.s32.totalorder %s199, %s200
      %p211 = scmp.eq.s32.totalorder %s23, 0
      %p212 = por %p210, %p211
      %p213 = scmp.ne.s32.totalorder %s199, %s200
      %p214 = scmp.eq.s32.totalorder %s24, 1
      %p215 = por %p213, %p214
      %p217 = scmp.ne.s32.totalorder %s200, %s216
      %p218 = scmp.eq.s32.totalorder %s24, 0
      %p219 = por %p217, %p218
      %s220 = ssub.s32 %s25, %s37
      %s221 = ssub.s32 %s26, %s33
      %s222 = sor.u32 %s220, %s221
      %p223 = scmp.eq.s32.totalorder %s222, 0
      %s225 = sadd.s32 %s224, 1
      %s226 = scalar_select %p223, %s224, %s225
      %p229 = pneg %p223
      %p230 = scmp.eq.s32.totalorder %s18, 1
      %p231 = por %p229, %p230
      %p232 = scmp.ne.s32.totalorder %s224, %s227
      %p233 = scmp.eq.s32.totalorder %s18, 0
      %p234 = por %p232, %p233
      %p235 = scmp.ne.s32.totalorder %s224, %s227
      %p236 = scmp.eq.s32.totalorder %s23, 1
      %p237 = por %p235, %p236
      %p238 = scmp.ne.s32.totalorder %s227, %s228
      %p239 = scmp.eq.s32.totalorder %s23, 0
      %p240 = por %p238, %p239
      %p241 = scmp.ne.s32.totalorder %s227, %s228
      %p242 = scmp.eq.s32.totalorder %s24, 1
      %p243 = por %p241, %p242
      %p245 = scmp.ne.s32.totalorder %s228, %s244
      %p246 = scmp.eq.s32.totalorder %s24, 0
      %p247 = por %p245, %p246
      %p248 = scmp.le.s32.totalorder 1, %s18
      %p249 = scmp.lt.s32.totalorder %s18, 3
      %p250 = pnand %p248, %p249
      %p251 = pneg %p250
      // Predicated region
      $region9: #{svq_forward.1} parent=5 // pred_check
        _
      $region10: #{svq_forward.1} parent=5 // pred_check_branch
        %253 = sbr.rel (%p250) target = $region12
      $region11: #{svq_forward.1} parent=5 // pred_region
        %s254 = ssub.s32 %s18, 1
        // Predicated region
        $region13: #{svq_forward.1} parent=11 // pred_check
          %p255 = pneg %p79
        $region14: #{svq_forward.1} parent=11 // pred_check_branch
          %257 = sbr.rel (%p255) target = $region16
        $region15: #{svq_forward.1} parent=11 // pred_region
          _
        $region16: #{svq_forward.1} parent=11 // pred_fallthru
          _
        // Predicated region
        $region17: #{svq_forward.1} parent=11 // pred_check
          %p258 = pneg %p100
        $region18: #{svq_forward.1} parent=11 // pred_check_branch
          %260 = sbr.rel (%p258) target = $region20
        $region19: #{svq_forward.1} parent=11 // pred_region
          _
        $region20: #{svq_forward.1} parent=11 // pred_fallthru
          _
        // Predicated region
        $region21: #{svq_forward.1} parent=11 // pred_check
          %p261 = pneg %p121
        $region22: #{svq_forward.1} parent=11 // pred_check_branch
          %263 = sbr.rel (%p261) target = $region24
        $region23: #{svq_forward.1} parent=11 // pred_region
          _
        $region24: #{svq_forward.1} parent=11 // pred_fallthru
          _
        // Predicated region
        $region25: #{svq_forward.1} parent=11 // pred_check
          %p264 = pneg %p142
        $region26: #{svq_forward.1} parent=11 // pred_check_branch
          %266 = sbr.rel (%p264) target = $region28
        $region27: #{svq_forward.1} parent=11 // pred_region
          _
        $region28: #{svq_forward.1} parent=11 // pred_fallthru
          _
        // Predicated region
        $region29: #{svq_forward.1} parent=11 // pred_check
          %p267 = pneg %p163
        $region30: #{svq_forward.1} parent=11 // pred_check_branch
          %269 = sbr.rel (%p267) target = $region32
        $region31: #{svq_forward.1} parent=11 // pred_region
          _
        $region32: #{svq_forward.1} parent=11 // pred_fallthru
          _
        // Predicated region
        $region33: #{svq_forward.1} parent=11 // pred_check
          %p270 = pneg %p184
        $region34: #{svq_forward.1} parent=11 // pred_check_branch
          %272 = sbr.rel (%p270) target = $region36
        $region35: #{svq_forward.1} parent=11 // pred_region
          _
        $region36: #{svq_forward.1} parent=11 // pred_fallthru
          _
      $region12: #{svq_forward.1} parent=5 // pred_fallthru
        _
      %p273 = scmp.lt.s32.totalorder %s18, 2
      // Predicated region
      $region37: #{svq_forward.1} parent=5 // pred_check
        %p274 = pneg %p273
      $region38: #{svq_forward.1} parent=5 // pred_check_branch
        %276 = sbr.rel (%p274) target = $region40
      $region39: #{svq_forward.1} parent=5 // pred_region
        // Predicated region
        $region41: #{svq_forward.1} parent=39 // pred_check
          %p277 = pneg %p52
        $region42: #{svq_forward.1} parent=39 // pred_check_branch
          %279 = sbr.rel (%p277) target = $region44
        $region43: #{svq_forward.1} parent=39 // pred_region
          %p280 = scmp.lt.s32.totalorder %s25, 1
          %s281 = scalar_select %p280, %s25, 1
          %p282 = scmp.lt.s32.totalorder %s26, 0
          %s283 = scalar_select %p282, %s26, 0
          %s284 = smul.addr %s281, 2
          %s285 = sadd.s32 %s283, %s284
          %s286 = smul.addr %s285, 8
          %s287 = scalar_lea.vmem %s0, %s286
        $region44: #{svq_forward.1} parent=39 // pred_fallthru
          _
      $region40: #{svq_forward.1} parent=5 // pred_fallthru
        _
      %p288 = scmp.le.s32.totalorder 1, %s18
      %p289 = scmp.lt.s32.totalorder %s18, 3
      %p290 = pnand %p288, %p289
      %p291 = pneg %p290
      // Predicated region
      $region45: #{svq_forward.1} parent=5 // pred_check
        _
      $region46: #{svq_forward.1} parent=5 // pred_check_branch
        %293 = sbr.rel (%p290) target = $region48
      $region47: #{svq_forward.1} parent=5 // pred_region
        %s294 = ssub.s32 %s18, 1
        %p295 = scmp.lt.s32.totalorder %s27, 1
        %s296 = scalar_select %p295, %s27, 1
        %p297 = scmp.lt.s32.totalorder %s28, 0
        %s298 = scalar_select %p297, %s28, 0
        %s299 = smul.addr %s296, 2
        %s300 = sadd.s32 %s298, %s299
        %s301 = smul.addr %s300, 8
        %s302 = scalar_lea.vmem %s0, %s301
        %p303 = pneg %p58
        %p304 = pneg %p55
        %p305 = pneg %p79
        %p306 = pneg %p76
        %p307 = pneg %p100
        %p308 = pneg %p97
        %p309 = pneg %p121
        %p310 = pneg %p118
        %p311 = pneg %p142
        %p312 = pneg %p139
        %p313 = pneg %p163
        %p314 = pneg %p160
        %p315 = pneg %p184
        %p316 = pneg %p181
        %p317 = pneg %p212
        %p318 = pneg %p209
        %p319 = scmp.lt.s32.totalorder %s27, 1
        %s320 = scalar_select %p319, %s27, 1
        %p321 = scmp.lt.s32.totalorder %s28, 0
        %s322 = scalar_select %p321, %s28, 0
        %s323 = smul.addr %s320, 2
        %s324 = sadd.s32 %s322, %s323
        %s325 = smul.addr %s324, 8
        %s326 = scalar_lea.vmem %s7, %s325
        %p327 = pneg %p240
        %p328 = pneg %p237
        %s329 = sand.u32 %s227, 1
        %s330 = scalar_lea.sflag [#allocation3], %s329
        %s331 = sand.u32 %s227, 1
        %s332 = smul.addr %s331, 64
        %s333 = scalar_lea.vmem [#allocation2], %s332
        %p334 = scmp.lt.s32.totalorder %s27, 1
        %s335 = scalar_select %p334, %s27, 1
        %p336 = scmp.lt.s32.totalorder %s28, 0
        %s337 = scalar_select %p336, %s28, 0
        %s338 = smul.addr %s335, 2
        %s339 = sadd.s32 %s337, %s338
        %s340 = smul.addr %s339, 8
        %s341 = scalar_lea.vmem %s0, %s340
        %p342 = scmp.lt.s32.totalorder %s27, 1
        %s343 = scalar_select %p342, %s27, 1
        %p344 = scmp.lt.s32.totalorder %s28, 0
        %s345 = scalar_select %p344, %s28, 0
        %s346 = smul.addr %s343, 2
        %s347 = sadd.s32 %s345, %s346
        %s348 = smul.addr %s347, 8
        %s349 = scalar_lea.vmem %s7, %s348
        %s350 = smul.u32 8, %s28
        %v352 = vld [vmem:[%s341] sm:$0xff]
        %v353 = vld [vmem:[%s341 + $0x8] sm:$0xff]
        %v354 = vpack.c.bf16 %v353, %v352
        %v355 = vld [vmem:[%s1] sm:$0xf]
        %v356 = vld [vmem:[%s1 + $0x4] sm:$0xf]
        %v357 = vld [vmem:[%s1 + $0x8] sm:$0xf]
        %v358 = vld [vmem:[%s1 + $0xc] sm:$0xf]
        %v359 = vld [vmem:[%s2] sm:$0xff]
        %v360 = vld [vmem:[%s2 + $0x8] sm:$0xff]
        %v361 = vld [vmem:[%s2 + $0x10] sm:$0xff]
        %v362 = vld [vmem:[%s2 + $0x18] sm:$0xff]
        %364 = vset.pattern.permute.xlu0 0
        %365 = vperm.xlu0 %364, %v359
        %v366 = vpop.permute.xlu0 %365
        %369 = vset.pattern.permute.xlu0 0
        %370 = vperm.xlu0 %369, %v360
        %v371 = vpop.permute.xlu0 %370
        %374 = vset.pattern.permute.xlu0 0
        %375 = vperm.xlu0 %374, %v361
        %v376 = vpop.permute.xlu0 %375
        %379 = vset.pattern.permute.xlu0 0
        %380 = vperm.xlu0 %379, %v362
        %v381 = vpop.permute.xlu0 %380
        %v387 = vunpack.c.l.b16 %v355
        %v388 = vunpack.c.l.b16 %v356
        %v389 = vunpack.c.l.b16 %v357
        %v390 = vunpack.c.l.b16 %v358
        %v391 = vpack.c.b16 %v388, %v387
        %v392 = vpack.c.b16 %v390, %v389
        %vm393 = vcmask 130048
        %v395 = vsel %vm393, %v391, 0
        %v398 = vsel %vm393, %v392, 0
        %400 = vmatpush.bf16.msra.mxu0 0
        %401 = vmatpush.bf16.msra.mxu0 0
        %402 = vmatpush.bf16.msra.mxu0 0
        %403 = vmatpush.bf16.msra.mxu0 0
        %404 = vmatpush.bf16.msra.mxu0 0
        %405 = vmatpush.bf16.msra.mxu0 0
        %406 = vmatpush.bf16.msra.mxu0 0
        %407 = vmatpush.bf16.msra.mxu0 %v354
        %408 = vmatmul.bf16.gmra.mxu0 %v395
        %v409 = vpop.f32.mrf.mxu0
        %v410 = vadd.f32 %v366, %v409
        %v411 = vpop.f32.mrf.mxu0
        %v412 = vadd.f32 %v371, %v411
        %413 = vmatmul.bf16.gmra.mxu0 %v398
        %v414 = vpop.f32.mrf.mxu0
        %v415 = vadd.f32 %v376, %v414
        %v416 = vpop.f32.mrf.mxu0
        %v417 = vadd.f32 %v381, %v416
        %418 = vdwg.mxu0
        %v419 = vmax.f32 %v410, 0.0
        %v420 = vmax.f32 %v412, 0.0
        %v421 = vmax.f32 %v415, 0.0
        %v422 = vmax.f32 %v417, 0.0
        %v423 = vpack.c.bf16 %v420, %v419
        %v424 = vpack.c.bf16 %v422, %v421
        %v425 = vld [vmem:[%s5] sm:$0xf]
        %v426 = vld [vmem:[%s5 + $0x4] sm:$0xf]
        %v427 = vld [vmem:[%s6] sm:$0xff]
        %v428 = vld [vmem:[%s6 + $0x8] sm:$0xff]
        %430 = vset.pattern.permute.xlu0 0
        %431 = vperm.xlu0 %430, %v427
        %v432 = vpop.permute.xlu0 %431
        %435 = vset.pattern.permute.xlu0 0
        %436 = vperm.xlu0 %435, %v428
        %v437 = vpop.permute.xlu0 %436
        %v441 = vunpack.c.l.b16 %v425
        %v442 = vunpack.c.l.b16 %v426
        %v443 = vpack.c.b16 %v442, %v441
        %vm444 = vcmask 261120
        %v446 = vsel %vm444, %v443, 0
        %448 = vmatpush.bf16.msra.mxu0 0
        %449 = vmatpush.bf16.msra.mxu0 0
        %450 = vmatpush.bf16.msra.mxu0 0
        %451 = vmatpush.bf16.msra.mxu0 0
        %452 = vmatpush.bf16.msra.mxu0 0
        %453 = vmatpush.bf16.msra.mxu0 0
        %454 = vmatpush.bf16.msra.mxu0 %v424
        %455 = vmatpush.bf16.msra.mxu0 %v423
        %456 = vmatmul.bf16.gmra.mxu0 %v446
        %v457 = vpop.f32.mrf.mxu0
        %v458 = vadd.f32 %v432, %v457
        %v459 = vpop.f32.mrf.mxu0
        %v460 = vadd.f32 %v437, %v459
        %461 = vdwg.mxu0
        %vm462 = vcmask 523264
        %463 = vst.msk [vmem:[%s349] sm:$0xff] %vm462, %v458
        %464 = vst.msk [vmem:[%s349 + $0x8] sm:$0xff] %vm462, %v460
        %465 = vxpose.xlu0.c.b16.start [1/8] %v423, 128
        %466 = vxpose.xlu0.c.b16.cont [2/8] %v424, 128
        %467 = vxpose.xlu0.c.b16.cont [3/8] 0, 128
        %468 = vxpose.xlu0.c.b16.cont [4/8] 0, 128
        %469 = vxpose.xlu0.c.b16.cont [5/8] 0, 128
        %470 = vxpose.xlu0.c.b16.cont [6/8] 0, 128
        %471 = vxpose.xlu0.c.b16.cont [7/8] 0, 128
        %472 = vxpose.xlu0.c.b16.end [8/8] 0, 128
        %v473 = vpop.trf.xlu0
        %v474 = vpop.trf.xlu0
        %v475 = vpop.trf.xlu0
        %v476 = vpop.trf.xlu0
        %v477 = vpop.trf.xlu0
        %v478 = vpop.trf.xlu0
        %v479 = vpop.trf.xlu0
        %v480 = vpop.trf.xlu0
        %v481 = vld [vmem:[%s3] sm:$0xf]
        %v482 = vld [vmem:[%s3 + $0x4] sm:$0xf]
        %v483 = vld [vmem:[%s3 + $0x8] sm:$0xf]
        %v484 = vld [vmem:[%s3 + $0xc] sm:$0xf]
        %v485 = vld [vmem:[%s4] sm:$0x1]
        %v487 = vperm.slane %v485, 0
        %v493 = vunpack.c.l.b16 %v481
        %v494 = vunpack.c.l.b16 %v482
        %v495 = vunpack.c.l.b16 %v483
        %v496 = vunpack.c.l.b16 %v484
        %v497 = vpack.c.b16 %v494, %v493
        %v498 = vpack.c.b16 %v496, %v495
        %v502 = vsel %vm444, %v473, 0
        %v505 = vsel %vm444, %v474, 0
        %v508 = vsel %vm444, %v475, 0
        %v511 = vsel %vm444, %v476, 0
        %513 = vmatpush.bf16.msra.mxu0 0
        %514 = vmatpush.bf16.msra.mxu0 0
        %515 = vmatpush.bf16.msra.mxu0 0
        %516 = vmatpush.bf16.msra.mxu0 0
        %517 = vmatpush.bf16.msra.mxu0 0
        %518 = vmatpush.bf16.msra.mxu0 0
        %519 = vmatpush.bf16.msra.mxu0 %v498
        %520 = vmatpush.bf16.msra.mxu0 %v497
        %521 = vmatmul.bf16.gmra.mxu0 %v502
        %v522 = vpop.f32.mrf.mxu0
        %v523 = vadd.f32 %v487, %v522
        %v524 = vpop.f32.mrf.mxu0
        %v525 = vadd.f32 %v487, %v524
        %526 = vmatmul.bf16.gmra.mxu0 %v505
        %v527 = vpop.f32.mrf.mxu0
        %v528 = vadd.f32 %v487, %v527
        %v529 = vpop.f32.mrf.mxu0
        %v530 = vadd.f32 %v487, %v529
        %531 = vmatmul.bf16.gmra.mxu0 %v508
        %v532 = vpop.f32.mrf.mxu0
        %v533 = vadd.f32 %v487, %v532
        %v534 = vpop.f32.mrf.mxu0
        %v535 = vadd.f32 %v487, %v534
        %536 = vmatmul.bf16.gmra.mxu0 %v511
        %v537 = vpop.f32.mrf.mxu0
        %v538 = vadd.f32 %v487, %v537
        %v539 = vpop.f32.mrf.mxu0
        %v540 = vadd.f32 %v487, %v539
        %541 = vdwg.mxu0
        %542 = vst.msk [vmem:[%s333] sm:$0xff] %vm462, %v523
        %543 = vst.msk [vmem:[%s333 + $0x8] sm:$0xff] %vm462, %v525
        %544 = vst.msk [vmem:[%s333 + $0x10] sm:$0xff] %vm462, %v528
        %545 = vst.msk [vmem:[%s333 + $0x18] sm:$0xff] %vm462, %v530
        %546 = vst.msk [vmem:[%s333 + $0x20] sm:$0xff] %vm462, %v533
        %547 = vst.msk [vmem:[%s333 + $0x28] sm:$0xff] %vm462, %v535
        %548 = vst.msk [vmem:[%s333 + $0x30] sm:$0xff] %vm462, %v538
        %549 = vst.msk [vmem:[%s333 + $0x38] sm:$0xff] %vm462, %v540
        %p550 = scmp.lt.s32.totalorder %s27, 1
        %s551 = scalar_select %p550, %s27, 1
        %p552 = scmp.lt.s32.totalorder %s28, 0
        %s553 = scalar_select %p552, %s28, 0
        %s554 = smul.addr %s551, 2
        %s555 = sadd.s32 %s553, %s554
        %s556 = smul.addr %s555, 8
        %s557 = scalar_lea.vmem %s7, %s556
        %s558 = sand.u32 %s227, 1
        %s559 = scalar_lea.sflag [#allocation3], %s558
        %s560 = sand.u32 %s227, 1
        %s561 = smul.addr %s560, 64
        %s562 = scalar_lea.vmem [#allocation2], %s561
        // Predicated region
        $region49: #{svq_forward.1} parent=47 // pred_check
          %p563 = pneg %p209
        $region50: #{svq_forward.1} parent=47 // pred_check_branch
          %565 = sbr.rel (%p563) target = $region52
        $region51: #{svq_forward.1} parent=47 // pred_region
          _
        $region52: #{svq_forward.1} parent=47 // pred_fallthru
          _
        // Predicated region
        $region53: #{svq_forward.1} parent=47 // pred_check
          %p566 = pneg %p237
        $region54: #{svq_forward.1} parent=47 // pred_check_branch
          %568 = sbr.rel (%p566) target = $region56
        $region55: #{svq_forward.1} parent=47 // pred_region
          %s569 = smul.u32 8, %s28
          %571 = vsyncadd %s559, 0
          %s572 = smul.addr %s27, 8
          %s573 = sadd.s32 %s569, %s572
          %s574 = smul.addr %s573, 8
          %s575 = scalar_lea.hbm %s8, %s574
          %s576 = sshll.u32 %s562, 4
          %s577 = int_to_ptr.vmem [resolvable:$true] %s576
          %s578 = sshll.u32 %s575, 4
          %s579 = int_to_ptr.hbm [resolvable:$true] %s578
          %584 = dma.vmem_to_hbm [thread:$0]  %s577, 1024, %s579, %s559, 128, 128, 8
        $region56: #{svq_forward.1} parent=47 // pred_fallthru
          _
      $region48: #{svq_forward.1} parent=5 // pred_fallthru
        _
      %p585 = scmp.le.s32.totalorder 2, %s18
      // Predicated region
      $region57: #{svq_forward.1} parent=5 // pred_check
        %p586 = pneg %p585
      $region58: #{svq_forward.1} parent=5 // pred_check_branch
        %588 = sbr.rel (%p586) target = $region60
      $region59: #{svq_forward.1} parent=5 // pred_region
        %s589 = ssub.s32 %s18, 2
        // Predicated region
        $region61: #{svq_forward.1} parent=59 // pred_check
          %p590 = pneg %p215
        $region62: #{svq_forward.1} parent=59 // pred_check_branch
          %592 = sbr.rel (%p590) target = $region64
        $region63: #{svq_forward.1} parent=59 // pred_region
          %p593 = scmp.lt.s32.totalorder %s29, 1
          %s594 = scalar_select %p593, %s29, 1
          %p595 = scmp.lt.s32.totalorder %s30, 0
          %s596 = scalar_select %p595, %s30, 0
          %s597 = smul.addr %s594, 2
          %s598 = sadd.s32 %s596, %s597
          %s599 = smul.addr %s598, 8
          %s600 = scalar_lea.vmem %s7, %s599
        $region64: #{svq_forward.1} parent=59 // pred_fallthru
          _
        // Predicated region
        $region65: #{svq_forward.1} parent=59 // pred_check
          %p601 = pneg %p243
        $region66: #{svq_forward.1} parent=59 // pred_check_branch
          %603 = sbr.rel (%p601) target = $region68
        $region67: #{svq_forward.1} parent=59 // pred_region
          %s604 = sand.u32 %s228, 1
          %s605 = scalar_lea.sflag [#allocation3], %s604
          %s606 = sand.u32 %s228, 1
          %s607 = smul.addr %s606, 64
          %s608 = scalar_lea.vmem [#allocation2], %s607
          %610 = dma.done %s605, 1024
        $region68: #{svq_forward.1} parent=59 // pred_fallthru
          _
      $region60: #{svq_forward.1} parent=5 // pred_fallthru
        _
    $region6: #{svq_forward.1} parent=1 // loop_footer
      %s22 = sadd.s32 1, %s18
    $region7: #{svq_forward.1} parent=1 // loop_footer_branch
      %17 = sbr.rel target = $region3
    $region8: #{svq_forward.1} parent=1 // loop_exit
      _
    %611 = vsyncpa [#allocation3], 1
    %s612 = scalar_lea.sflag [#allocation3], 1
    %613 = vsyncpa %s612, 1

</llo_original>
